<compile_context>
chip_gen: v7x
topology: tpu7x:2x2x1
jax: 0.10.0
libtpu: 0.0.40
codegen_flags: <defaults>
</compile_context>

<pallas_src>
import functools

import jax
import jax.numpy as jnp
from jax.experimental import pallas as pl
from jax.experimental.pallas import tpu as pltpu

_MiB = 1 << 20
_WEIGHT_CHUNK_BUDGET = 32 * _MiB   # resident weight-chunk target (v7x: 64 MiB per TC)
_TOTAL_VMEM_BUDGET = 44 * _MiB     # whole tile-plan target, leaves headroom on v7x


def _round_up(x: int, m: int) -> int:
    return (x + m - 1) // m * m


def _lane_mult(dim: int) -> int:
    # v6e/v7x MXUs are 2x256x256: use 256-wide padding for larger dims, but keep
    # tiny dims at 128 so we don't inflate wasted FLOPs (review: v6e item).
    return 256 if dim >= 512 else 128


def _choose_tile_h(hp: int, kp: int, np_: int, itemsize: int, budget: int) -> int:
    """Largest multiple of 128 that divides Hp whose weight chunk fits `budget`."""
    m = hp // 128
    best = 128
    for d in range(1, m + 1):
        if m % d:
            continue
        th = 128 * d
        if (kp * th + th * np_) * itemsize + 8 * th * 4 <= budget:
            best = th
    return best


def _vmem_plan_bytes(tile_b, tile_h, kp, np_, itemsize, out_itemsize, n_h, single_buf):
    """VMEM footprint of the tile plan (used for tile shrinking + vmem_limit_bytes)."""
    w_bufs = 1 if (n_h == 1 and single_buf) else 2
    weights = w_bufs * (kp * tile_h + tile_h * np_) * itemsize
    biases = w_bufs * 8 * tile_h * 4 + 8 * np_ * 4
    x_tile = 2 * tile_b * kp * itemsize            # double-buffered input tile
    out_tile = 2 * tile_b * np_ * out_itemsize     # double-buffered output tile
    acc = tile_b * np_ * 4                         # f32 accumulator scratch
    h_mid = tile_b * tile_h * (4 + itemsize)       # f32 hidden + matmul-dtype copy
    return weights + biases + x_tile + out_tile + acc + h_mid


def _spec(shape, index_map, mode):
    if mode is None:
        return pl.BlockSpec(shape, index_map)
    return pl.BlockSpec(shape, index_map, pipeline_mode=mode)


# ----------------------------------------------------------------------------
# One-time parameter preparation (hoisted out of the per-call forward).
# ----------------------------------------------------------------------------
def prepare_params(w1, b1, w2, b2, *, compute_dtype=jnp.bfloat16):
    """Pad/cast NeuralNet parameters once.

    w1: (inputSize, hiddenSize)   b1: (hiddenSize,)
    w2: (hiddenSize, numClasses)  b2: (numClasses,)
    Returns ((w1p, b1p, w2p, b2p), (inputSize, hiddenSize, numClasses)).
    Weights are lane-padded and cast to compute_dtype; biases are f32, padded
    and replicated to 8 sublane rows so every in-kernel load is sublane-dense.
    """
    K, H = w1.shape
    N = w2.shape[1]
    Kp = _round_up(K, _lane_mult(K))
    Hp = _round_up(H, _lane_mult(H))
    Np = _round_up(N, _lane_mult(N))
    cd = compute_dtype
    w1p = jnp.zeros((Kp, Hp), cd).at[:K, :H].set(w1.astype(cd))
    w2p = jnp.zeros((Hp, Np), cd).at[:H, :N].set(w2.astype(cd))
    b1p = jnp.zeros((8, Hp), jnp.float32).at[:, :H].set(
        jnp.broadcast_to(b1.astype(jnp.float32), (8, H)))
    b2p = jnp.zeros((8, Np), jnp.float32).at[:, :N].set(
        jnp.broadcast_to(b2.astype(jnp.float32), (8, N)))
    return (w1p, b1p, w2p, b2p), (K, H, N)


# ----------------------------------------------------------------------------
# Kernel: out = relu(x @ W1 + b1) @ W2 + b2, hidden dim optionally chunked.
# ----------------------------------------------------------------------------
def _mlp_kernel(x_ref, w1_ref, b1_ref, w2_ref, b2_ref, o_ref, acc_ref):
    h_step = pl.program_id(1)

    @pl.when(h_step == 0)
    def _init():
        acc_ref[...] = jnp.zeros_like(acc_ref)

    # Layer 1 on this hidden chunk: MXU matmul with f32 accumulation,
    # bias add + ReLU in f32 on the VPU (exact per-chunk since ReLU is elementwise).
    h = jnp.dot(x_ref[...], w1_ref[...], preferred_element_type=jnp.float32)
    h = jnp.maximum(h + b1_ref[0:1, :], 0.0)

    # Layer 2 partial product for this chunk, accumulated in f32.
    acc_ref[...] += jnp.dot(h.astype(w2_ref.dtype), w2_ref[...],
                            preferred_element_type=jnp.float32)

    @pl.when(h_step == pl.num_programs(1) - 1)
    def _finalize():
        o_ref[...] = (acc_ref[...] + b2_ref[0:1, :]).astype(o_ref.dtype)


@functools.partial(jax.jit, static_argnames=("num_classes", "tile_b", "tile_h",
                                             "weights_single_buffered"))
def neural_net_forward(x, w1p, b1p, w2p, b2p, *, num_classes,
                       tile_b=1024, tile_h=None, weights_single_buffered=True):
    """Fused nn.Linear -> ReLU -> nn.Linear forward (pre-padded params)."""
    B, K = x.shape
    Kp, Hp = w1p.shape
    Np = w2p.shape[1]
    cd = w1p.dtype
    itemsize = jnp.dtype(cd).itemsize
    out_dtype = x.dtype
    out_itemsize = jnp.dtype(out_dtype).itemsize
    sub = max(8, 32 // itemsize)          # sublane packing: 8 rows f32, 16 rows bf16

    # --- Hidden-dim chunking (keeps resident weight chunk within the VMEM budget,
    #     relevant on v7x where physical VMEM is 64 MiB per TensorCore). ---
    if tile_h is None:
        TILE_H = _choose_tile_h(Hp, Kp, Np, itemsize, _WEIGHT_CHUNK_BUDGET)
    else:
        if tile_h % 128 or Hp % tile_h:
            raise ValueError("tile_h must be a multiple of 128 that divides padded H")
        TILE_H = tile_h
    n_h = Hp // TILE_H

    # --- Batch tiling: as large as the VMEM plan allows. ---
    TILE_B = min(_round_up(B, sub), _round_up(tile_b, sub))
    while (TILE_B > sub and
           _vmem_plan_bytes(TILE_B, TILE_H, Kp, Np, itemsize, out_itemsize,
                            n_h, weights_single_buffered) > _TOTAL_VMEM_BUDGET):
        TILE_B = max(sub, _round_up(TILE_B // 2, sub))
    Bp = _round_up(B, TILE_B)
    # v7x megacore: make sure the "parallel" batch axis has >= 2 steps when possible.
    if Bp // TILE_B == 1 and TILE_B >= 2 * sub:
        TILE_B = _round_up(TILE_B // 2, sub)
        Bp = _round_up(B, TILE_B)
    n_b = Bp // TILE_B

    # --- Conditional activation pad/cast (skipped entirely for aligned inputs). ---
    xp = x.astype(cd) if x.dtype != cd else x
    if Bp != B or Kp != K:
        xp = jnp.pad(xp, ((0, Bp - B), (0, Kp - K)))   # zero pad => math is exact

    # --- BlockSpecs: weights/biases with a constant index stay VMEM-resident and
    #     request a single buffer; chunked weights keep default double-buffering. ---
    resident = pl.Buffered(1) if weights_single_buffered else None
    w_mode = resident if n_h == 1 else None
    in_specs = [
        _spec((TILE_B, Kp), lambda i, h: (i, 0), None),        # x: tiled on batch
        _spec((Kp, TILE_H), lambda i, h: (0, h), w_mode),       # W1 (chunked on H)
        _spec((8, TILE_H), lambda i, h: (0, h), w_mode),        # b1 (chunked on H)
        _spec((TILE_H, Np), lambda i, h: (h, 0), w_mode),       # W2 (chunked on H)
        _spec((8, Np), lambda i, h: (0, 0), resident),          # b2 (always resident)
    ]
    out_spec = pl.BlockSpec((TILE_B, Np), lambda i, h: (i, 0))

    plan_bytes = _vmem_plan_bytes(TILE_B, TILE_H, Kp, Np, itemsize, out_itemsize,
                                  n_h, weights_single_buffered)
    vmem_limit = min(64 * _MiB, max(int(plan_bytes * 1.25), 16 * _MiB))

    flops = 2 * Bp * (Kp * Hp + Hp * Np)
    bytes_accessed = (Bp * Kp * itemsize + (Kp * Hp + Hp * Np) * itemsize
                      + 8 * (Hp + Np) * 4 + Bp * Np * out_itemsize)

    out_pad = pl.pallas_call(
        _mlp_kernel,
        out_shape=jax.ShapeDtypeStruct((Bp, Np), out_dtype),
        grid_spec=pltpu.PrefetchScalarGridSpec(
            num_scalar_prefetch=0,
            grid=(n_b, n_h),
            in_specs=in_specs,
            out_specs=out_spec,
            scratch_shapes=[pltpu.VMEM((TILE_B, Np), jnp.float32)]),
        compiler_params=pltpu.CompilerParams(
            dimension_semantics=("parallel", "arbitrary"),
            vmem_limit_bytes=vmem_limit),
        cost_estimate=pl.CostEstimate(
            flops=flops, transcendentals=0, bytes_accessed=bytes_accessed),
    )(xp, w1p, b1p, w2p, b2p)

    if Bp != B or Np != num_classes:
        out_pad = out_pad[:B, :num_classes]     # strip padding outside the kernel
    return out_pad


# Memoized fallback: pl.Buffered(1) on resident weights is the preferred path; if
# this build's Mosaic rejects single-buffered top-level specs, fall back once.
_SINGLE_BUFFER_OK = True


def neural_net_apply(x, padded_params, dims, **kwargs):
    global _SINGLE_BUFFER_OK
    w1p, b1p, w2p, b2p = padded_params
    num_classes = dims[2]
    if _SINGLE_BUFFER_OK:
        try:
            return neural_net_forward(x, w1p, b1p, w2p, b2p, num_classes=num_classes,
                                      weights_single_buffered=True, **kwargs)
        except Exception:
            _SINGLE_BUFFER_OK = False
    return neural_net_forward(x, w1p, b1p, w2p, b2p, num_classes=num_classes,
                              weights_single_buffered=False, **kwargs)


if __name__ == "__main__":
    key = jax.random.PRNGKey(0)

    def make_params(k, in_dim, hid, ncls):
        k1, k2, k3, k4 = jax.random.split(k, 4)
        bound1 = 1.0 / jnp.sqrt(in_dim)
        w1 = jax.random.uniform(k1, (in_dim, hid), minval=-bound1, maxval=bound1,
                                dtype=jnp.float32)
        b1 = jax.random.uniform(k2, (hid,), minval=-bound1, maxval=bound1,
                                dtype=jnp.float32)
        bound2 = 1.0 / jnp.sqrt(hid)
        w2 = jax.random.uniform(k3, (hid, ncls), minval=-bound2, maxval=bound2,
                                dtype=jnp.float32)
        b2 = jax.random.uniform(k4, (ncls,), minval=-bound2, maxval=bound2,
                                dtype=jnp.float32)
        return w1, b1, w2, b2

    def reference(x, w1, b1, w2, b2):
        return jnp.maximum(x @ w1 + b1, 0.0) @ w2 + b2

    # --- Test 1: NeuralNet(32, 64, 16), batch 8 (module-scale shapes). ---
    kx, kp, key = jax.random.split(key, 3)
    B, IN, HID, NC = 8, 32, 64, 16
    x = jax.random.normal(kx, (B, IN), dtype=jnp.float32)
    w1, b1, w2, b2 = make_params(kp, IN, HID, NC)
    ref = reference(x, w1, b1, w2, b2)

    params_f32, dims = prepare_params(w1, b1, w2, b2, compute_dtype=jnp.float32)
    out_f32 = jax.block_until_ready(neural_net_apply(x, params_f32, dims))
    assert out_f32.shape == (B, NC) and out_f32.dtype == x.dtype
    assert jnp.allclose(out_f32, ref, atol=1e-4, rtol=1e-4)

    params_bf16, dims = prepare_params(w1, b1, w2, b2, compute_dtype=jnp.bfloat16)
    out_bf16 = jax.block_until_ready(neural_net_apply(x, params_bf16, dims))
    assert out_bf16.shape == (B, NC)
    assert jnp.allclose(out_bf16, ref, atol=5e-2, rtol=5e-2)

    # --- Test 2: aligned shapes (no x pad), megacore batch split, H-chunked path. ---
    kx2, kp2, key = jax.random.split(key, 3)
    B2, IN2, HID2, NC2 = 64, 256, 512, 128
    x2 = jax.random.normal(kx2, (B2, IN2), dtype=jnp.float32)
    p2 = make_params(kp2, IN2, HID2, NC2)
    ref2 = reference(x2, *p2)
    params2, dims2 = prepare_params(*p2, compute_dtype=jnp.float32)
    out_full = jax.block_until_ready(neural_net_apply(x2, params2, dims2))
    out_chunk = jax.block_until_ready(neural_net_apply(x2, params2, dims2, tile_h=128))
    assert out_full.shape == (B2, NC2) and out_chunk.shape == (B2, NC2)
    assert jnp.allclose(out_chunk, out_full, atol=1e-4, rtol=1e-4)
    assert jnp.allclose(out_full, ref2, atol=5e-2, rtol=5e-2)

    print("KERNEL_OK")
</pallas_src>

<mosaic_0001>
module attributes {stable_mosaic.version = 11 : i64} {
  func.func @_mlp_kernel(%arg0: i32, %arg1: i32, %arg2: memref<8x128xf32, #tpu.memory_space<vmem>>, %arg3: memref<128x128xf32, #tpu.memory_space<vmem>>, %arg4: memref<8x128xf32, #tpu.memory_space<vmem>>, %arg5: memref<128x128xf32, #tpu.memory_space<vmem>>, %arg6: memref<8x128xf32, #tpu.memory_space<vmem>>, %arg7: memref<8x128xf32, #tpu.memory_space<vmem>>, %arg8: memref<8x128xf32, #tpu.memory_space<vmem>>) attributes {dimension_semantics = [#tpu.dimension_semantics<parallel>, #tpu.dimension_semantics<arbitrary>], iteration_bounds = array<i64: 1, 1>, scalar_prefetch = 0 : i64, scratch_operands = 1 : i64, tpu.core_type = #tpu.core_type<tc>, window_params = [{transform_indices = @transform_0, window_bounds = array<i64: 8, 128>}, {pipeline_mode = #tpu.pipeline_mode<synchronous>, transform_indices = @transform_1, window_bounds = array<i64: 128, 128>}, {pipeline_mode = #tpu.pipeline_mode<synchronous>, transform_indices = @transform_2, window_bounds = array<i64: 8, 128>}, {pipeline_mode = #tpu.pipeline_mode<synchronous>, transform_indices = @transform_3, window_bounds = array<i64: 128, 128>}, {pipeline_mode = #tpu.pipeline_mode<synchronous>, transform_indices = @transform_4, window_bounds = array<i64: 8, 128>}, {transform_indices = @transform_5, window_bounds = array<i64: 8, 128>}]} {
    %c0_i32 = arith.constant 0 : i32
    %0 = arith.cmpi eq, %arg1, %c0_i32 : i32
    %1 = arith.extui %0 : i1 to i32
    %c0_i32_0 = arith.constant 0 : i32
    %2 = arith.cmpi ne, %1, %c0_i32_0 : i32
    scf.if %2 {
      %cst_16 = arith.constant 0.000000e+00 : f32
      %19 = vector.broadcast %cst_16 : f32 to vector<8x128xf32>
      %c0_17 = arith.constant 0 : index
      %c0_18 = arith.constant 0 : index
      %20 = vector.load %arg8[%c0_17, %c0_18] : memref<8x128xf32, #tpu.memory_space<vmem>>, vector<8x128xf32>
      tpu.vector_store %arg8[%c0_17, %c0_18], %19 {strides = array<i32>} : memref<8x128xf32, #tpu.memory_space<vmem>>, vector<8x128xf32>,
    } else {
    }
    %c0 = arith.constant 0 : index
    %c0_1 = arith.constant 0 : index
    %3 = vector.load %arg2[%c0, %c0_1] : memref<8x128xf32, #tpu.memory_space<vmem>>, vector<8x128xf32>
    %c0_2 = arith.constant 0 : index
    %c0_3 = arith.constant 0 : index
    %4 = vector.load %arg3[%c0_2, %c0_3] : memref<128x128xf32, #tpu.memory_space<vmem>>, vector<128x128xf32>
    %cst = arith.constant dense<0.000000e+00> : vector<8x128xf32>
    %5 = tpu.matmul %3, %4, %cst {dimension_numbers = #tpu.dot_dimension_numbers<[1], [0], [0], [1], [0, 0, 1, 1], [], []>} : vector<8x128xf32>, vector<128x128xf32>, vector<8x128xf32> -> vector<8x128xf32>
    %c0_4 = arith.constant 0 : index
    %c0_5 = arith.constant 0 : index
    %6 = vector.load %arg4[%c0_4, %c0_5] : memref<8x128xf32, #tpu.memory_space<vmem>>, vector<1x128xf32>
    %7 = vector.broadcast %6 : vector<1x128xf32> to vector<8x128xf32>
    %8 = arith.addf %5, %7 : vector<8x128xf32>
    %cst_6 = arith.constant 0.000000e+00 : f32
    %9 = vector.broadcast %cst_6 : f32 to vector<8x128xf32>
    %10 = arith.maximumf %8, %9 : vector<8x128xf32>
    %c0_7 = arith.constant 0 : index
    %c0_8 = arith.constant 0 : index
    %11 = vector.load %arg8[%c0_7, %c0_8] : memref<8x128xf32, #tpu.memory_space<vmem>>, vector<8x128xf32>
    %c0_9 = arith.constant 0 : index
    %c0_10 = arith.constant 0 : index
    %12 = vector.load %arg5[%c0_9, %c0_10] : memref<128x128xf32, #tpu.memory_space<vmem>>, vector<128x128xf32>
    %cst_11 = arith.constant dense<0.000000e+00> : vector<8x128xf32>
    %13 = tpu.matmul %10, %12, %cst_11 {dimension_numbers = #tpu.dot_dimension_numbers<[1], [0], [0], [1], [0, 0, 1, 1], [], []>} : vector<8x128xf32>, vector<128x128xf32>, vector<8x128xf32> -> vector<8x128xf32>
    %14 = arith.addf %11, %13 : vector<8x128xf32>
    %c0_12 = arith.constant 0 : index
    %c0_13 = arith.constant 0 : index
    %15 = vector.load %arg8[%c0_12, %c0_13] : memref<8x128xf32, #tpu.memory_space<vmem>>, vector<8x128xf32>
    tpu.vector_store %arg8[%c0_12, %c0_13], %14 {strides = array<i32>} : memref<8x128xf32, #tpu.memory_space<vmem>>, vector<8x128xf32>,
    %c0_i32_14 = arith.constant 0 : i32
    %16 = arith.cmpi eq, %arg1, %c0_i32_14 : i32
    %17 = arith.extui %16 : i1 to i32
    %c0_i32_15 = arith.constant 0 : i32
    %18 = arith.cmpi ne, %17, %c0_i32_15 : i32
    scf.if %18 {
      %c0_16 = arith.constant 0 : index
      %c0_17 = arith.constant 0 : index
      %19 = vector.load %arg8[%c0_16, %c0_17] : memref<8x128xf32, #tpu.memory_space<vmem>>, vector<8x128xf32>
      %c0_18 = arith.constant 0 : index
      %c0_19 = arith.constant 0 : index
      %20 = vector.load %arg6[%c0_18, %c0_19] : memref<8x128xf32, #tpu.memory_space<vmem>>, vector<1x128xf32>
      %21 = vector.broadcast %20 : vector<1x128xf32> to vector<8x128xf32>
      %22 = arith.addf %19, %21 : vector<8x128xf32>
      %c0_20 = arith.constant 0 : index
      %c0_21 = arith.constant 0 : index
      %23 = vector.load %arg7[%c0_20, %c0_21] : memref<8x128xf32, #tpu.memory_space<vmem>>, vector<8x128xf32>
      tpu.vector_store %arg7[%c0_20, %c0_21], %22 {strides = array<i32>} : memref<8x128xf32, #tpu.memory_space<vmem>>, vector<8x128xf32>,
    } else {
    }
    return
  }
  func.func @transform_0(%arg0: i32, %arg1: i32) -> (i32, i32) {
    %c0_i32 = arith.constant 0 : i32
    %c0_i32_0 = arith.constant 0 : i32
    return %arg0, %c0_i32 : i32, i32
  }
  func.func @transform_1(%arg0: i32, %arg1: i32) -> (i32, i32) {
    %c0_i32 = arith.constant 0 : i32
    %c0_i32_0 = arith.constant 0 : i32
    return %c0_i32, %arg1 : i32, i32
  }
  func.func @transform_2(%arg0: i32, %arg1: i32) -> (i32, i32) {
    %c0_i32 = arith.constant 0 : i32
    %c0_i32_0 = arith.constant 0 : i32
    return %c0_i32, %arg1 : i32, i32
  }
  func.func @transform_3(%arg0: i32, %arg1: i32) -> (i32, i32) {
    %c0_i32 = arith.constant 0 : i32
    %c0_i32_0 = arith.constant 0 : i32
    return %arg1, %c0_i32 : i32, i32
  }
  func.func @transform_4(%arg0: i32, %arg1: i32) -> (i32, i32) {
    %c0_i32 = arith.constant 0 : i32
    %c0_i32_0 = arith.constant 0 : i32
    %c0_i32_1 = arith.constant 0 : i32
    return %c0_i32, %c0_i32_0 : i32, i32
  }
  func.func @transform_5(%arg0: i32, %arg1: i32) -> (i32, i32) {
    %c0_i32 = arith.constant 0 : i32
    %c0_i32_0 = arith.constant 0 : i32
    return %arg0, %c0_i32 : i32, i32
  }
}

module attributes {stable_mosaic.version = 11 : i64} {
  func.func @_mlp_kernel(%arg0: i32, %arg1: i32, %arg2: memref<8x128xf32, #tpu.memory_space<vmem>>, %arg3: memref<128x128xf32, #tpu.memory_space<vmem>>, %arg4: memref<8x128xf32, #tpu.memory_space<vmem>>, %arg5: memref<128x128xf32, #tpu.memory_space<vmem>>, %arg6: memref<8x128xf32, #tpu.memory_space<vmem>>, %arg7: memref<8x128xf32, #tpu.memory_space<vmem>>, %arg8: memref<8x128xf32, #tpu.memory_space<vmem>>) attributes {dimension_semantics = [#tpu.dimension_semantics<parallel>, #tpu.dimension_semantics<arbitrary>], iteration_bounds = array<i64: 1, 1>, scalar_prefetch = 0 : i64, scratch_operands = 1 : i64, tpu.core_type = #tpu.core_type<tc>, window_params = [{transform_indices = @transform_0, window_bounds = array<i64: 8, 128>}, {transform_indices = @transform_1, window_bounds = array<i64: 128, 128>}, {transform_indices = @transform_2, window_bounds = array<i64: 8, 128>}, {transform_indices = @transform_3, window_bounds = array<i64: 128, 128>}, {pipeline_mode = #tpu.pipeline_mode<synchronous>, transform_indices = @transform_4, window_bounds = array<i64: 8, 128>}, {transform_indices = @transform_5, window_bounds = array<i64: 8, 128>}]} {
    %c0_i32 = arith.constant 0 : i32
    %0 = arith.cmpi eq, %arg1, %c0_i32 : i32
    %1 = arith.extui %0 : i1 to i32
    %c0_i32_0 = arith.constant 0 : i32
    %2 = arith.cmpi ne, %1, %c0_i32_0 : i32
    scf.if %2 {
      %cst_16 = arith.constant 0.000000e+00 : f32
      %19 = vector.broadcast %cst_16 : f32 to vector<8x128xf32>
      %c0_17 = arith.constant 0 : index
      %c0_18 = arith.constant 0 : index
      %20 = vector.load %arg8[%c0_17, %c0_18] : memref<8x128xf32, #tpu.memory_space<vmem>>, vector<8x128xf32>
      tpu.vector_store %arg8[%c0_17, %c0_18], %19 {strides = array<i32>} : memref<8x128xf32, #tpu.memory_space<vmem>>, vector<8x128xf32>,
    } else {
    }
    %c0 = arith.constant 0 : index
    %c0_1 = arith.constant 0 : index
    %3 = vector.load %arg2[%c0, %c0_1] : memref<8x128xf32, #tpu.memory_space<vmem>>, vector<8x128xf32>
    %c0_2 = arith.constant 0 : index
    %c0_3 = arith.constant 0 : index
    %4 = vector.load %arg3[%c0_2, %c0_3] : memref<128x128xf32, #tpu.memory_space<vmem>>, vector<128x128xf32>
    %cst = arith.constant dense<0.000000e+00> : vector<8x128xf32>
    %5 = tpu.matmul %3, %4, %cst {dimension_numbers = #tpu.dot_dimension_numbers<[1], [0], [0], [1], [0, 0, 1, 1], [], []>} : vector<8x128xf32>, vector<128x128xf32>, vector<8x128xf32> -> vector<8x128xf32>
    %c0_4 = arith.constant 0 : index
    %c0_5 = arith.constant 0 : index
    %6 = vector.load %arg4[%c0_4, %c0_5] : memref<8x128xf32, #tpu.memory_space<vmem>>, vector<1x128xf32>
    %7 = vector.broadcast %6 : vector<1x128xf32> to vector<8x128xf32>
    %8 = arith.addf %5, %7 : vector<8x128xf32>
    %cst_6 = arith.constant 0.000000e+00 : f32
    %9 = vector.broadcast %cst_6 : f32 to vector<8x128xf32>
    %10 = arith.maximumf %8, %9 : vector<8x128xf32>
    %c0_7 = arith.constant 0 : index
    %c0_8 = arith.constant 0 : index
    %11 = vector.load %arg8[%c0_7, %c0_8] : memref<8x128xf32, #tpu.memory_space<vmem>>, vector<8x128xf32>
    %c0_9 = arith.constant 0 : index
    %c0_10 = arith.constant 0 : index
    %12 = vector.load %arg5[%c0_9, %c0_10] : memref<128x128xf32, #tpu.memory_space<vmem>>, vector<128x128xf32>
    %cst_11 = arith.constant dense<0.000000e+00> : vector<8x128xf32>
    %13 = tpu.matmul %10, %12, %cst_11 {dimension_numbers = #tpu.dot_dimension_numbers<[1], [0], [0], [1], [0, 0, 1, 1], [], []>} : vector<8x128xf32>, vector<128x128xf32>, vector<8x128xf32> -> vector<8x128xf32>
    %14 = arith.addf %11, %13 : vector<8x128xf32>
    %c0_12 = arith.constant 0 : index
    %c0_13 = arith.constant 0 : index
    %15 = vector.load %arg8[%c0_12, %c0_13] : memref<8x128xf32, #tpu.memory_space<vmem>>, vector<8x128xf32>
    tpu.vector_store %arg8[%c0_12, %c0_13], %14 {strides = array<i32>} : memref<8x128xf32, #tpu.memory_space<vmem>>, vector<8x128xf32>,
    %c0_i32_14 = arith.constant 0 : i32
    %16 = arith.cmpi eq, %arg1, %c0_i32_14 : i32
    %17 = arith.extui %16 : i1 to i32
    %c0_i32_15 = arith.constant 0 : i32
    %18 = arith.cmpi ne, %17, %c0_i32_15 : i32
    scf.if %18 {
      %c0_16 = arith.constant 0 : index
      %c0_17 = arith.constant 0 : index
      %19 = vector.load %arg8[%c0_16, %c0_17] : memref<8x128xf32, #tpu.memory_space<vmem>>, vector<8x128xf32>
      %c0_18 = arith.constant 0 : index
      %c0_19 = arith.constant 0 : index
      %20 = vector.load %arg6[%c0_18, %c0_19] : memref<8x128xf32, #tpu.memory_space<vmem>>, vector<1x128xf32>
      %21 = vector.broadcast %20 : vector<1x128xf32> to vector<8x128xf32>
      %22 = arith.addf %19, %21 : vector<8x128xf32>
      %c0_20 = arith.constant 0 : index
      %c0_21 = arith.constant 0 : index
      %23 = vector.load %arg7[%c0_20, %c0_21] : memref<8x128xf32, #tpu.memory_space<vmem>>, vector<8x128xf32>
      tpu.vector_store %arg7[%c0_20, %c0_21], %22 {strides = array<i32>} : memref<8x128xf32, #tpu.memory_space<vmem>>, vector<8x128xf32>,
    } else {
    }
    return
  }
  func.func @transform_0(%arg0: i32, %arg1: i32) -> (i32, i32) {
    %c0_i32 = arith.constant 0 : i32
    %c0_i32_0 = arith.constant 0 : i32
    return %arg0, %c0_i32 : i32, i32
  }
  func.func @transform_1(%arg0: i32, %arg1: i32) -> (i32, i32) {
    %c0_i32 = arith.constant 0 : i32
    %c0_i32_0 = arith.constant 0 : i32
    return %c0_i32, %arg1 : i32, i32
  }
  func.func @transform_2(%arg0: i32, %arg1: i32) -> (i32, i32) {
    %c0_i32 = arith.constant 0 : i32
    %c0_i32_0 = arith.constant 0 : i32
    return %c0_i32, %arg1 : i32, i32
  }
  func.func @transform_3(%arg0: i32, %arg1: i32) -> (i32, i32) {
    %c0_i32 = arith.constant 0 : i32
    %c0_i32_0 = arith.constant 0 : i32
    return %arg1, %c0_i32 : i32, i32
  }
  func.func @transform_4(%arg0: i32, %arg1: i32) -> (i32, i32) {
    %c0_i32 = arith.constant 0 : i32
    %c0_i32_0 = arith.constant 0 : i32
    %c0_i32_1 = arith.constant 0 : i32
    return %c0_i32, %c0_i32_0 : i32, i32
  }
  func.func @transform_5(%arg0: i32, %arg1: i32) -> (i32, i32) {
    %c0_i32 = arith.constant 0 : i32
    %c0_i32_0 = arith.constant 0 : i32
    return %arg0, %c0_i32 : i32, i32
  }
}

</mosaic_0001>

<llo_original>
// kernel: neural_net_forward.1
$region0: #{neural_net_forward.1}
  #allocation0 [shape = 'u32[]', space=smem, size = 0x4, offset = 0x4, fixed_abs, tag = 'smem constant byte address 0x4 - core index']
  #allocation1 [shape = 'u32[144,128]{1,0:T(1,128)}', space=vmem, size = 0x12000, scoped, tag = 'internal scratch']
  #allocation2 [shape = 'f32[8,128]{1,0:T(8,128)}', space=vmem, size = 0x1000, scoped, tag = 'scratch operand']
  %s0 = inlined_call_operand.vmem [shape: f32[8,128], index: 0, kind: input, shape index: {}]
  %s1 = inlined_call_operand.hbm [shape: f32[128,128], index: 1, kind: input, shape index: {}]
  %s2 = inlined_call_operand.vmem [shape: f32[8,128], index: 2, kind: input, shape index: {}]
  %s3 = inlined_call_operand.hbm [shape: f32[128,128], index: 3, kind: input, shape index: {}]
  %s4 = inlined_call_operand.vmem [shape: f32[8,128], index: 4, kind: input, shape index: {}]
  %s5 = inlined_call_operand.hbm [shape: f32[8,128], index: 5, kind: output, shape index: {}]
  %s6 = sld [smem:[#allocation0]]
  $region46: #{neural_net_forward.1} parent=0
    _
  %s8 = ssub.s32 1, %s6
  %s9 = scalar_select 0, %s8, %s6
  $region1: #{neural_net_forward.1} parent=0
    #allocation3 [shape = 'u8[65536]{0}', space=vmem, size = 0x10000, scoped, tag = 'input window, operand 1, single buffered']
    #allocation4 [shape = 's32[1]{0}', space=sflag, size = 0x4, scoped, tag = 'scoped memory for neural_net_forward.1']
    #allocation5 [shape = 's32[1]{0}', space=sflag, size = 0x4, scoped, tag = 'scoped memory for neural_net_forward.1']
    #allocation6 [shape = 'u8[65536]{0}', space=vmem, size = 0x10000, scoped, tag = 'input window, operand 3, single buffered']
    #allocation7 [shape = 's32[1]{0}', space=sflag, size = 0x4, scoped, tag = 'scoped memory for neural_net_forward.1']
    #allocation8 [shape = 'u8[4096]{0}', space=vmem, size = 0x1000, scoped, tag = 'output window, operand 0, single buffered']
    %10 = vsyncpa [#allocation4], 0
    %11 = vsyncpa [#allocation7], 0
    %12 = vsyncpa [#allocation5], 0
    // Predicated region
    $region2: #{neural_net_forward.1} parent=1 // pred_check
      _
    $region3: #{neural_net_forward.1} parent=1 // pred_check_branch
      %14 = sbr.rel (0) target = $region5
    $region4: #{neural_net_forward.1} parent=1 // pred_region
      _
    $region5: #{neural_net_forward.1} parent=1 // pred_fallthru
      _
    // Predicated region
    $region6: #{neural_net_forward.1} parent=1 // pred_check
      _
    $region7: #{neural_net_forward.1} parent=1 // pred_check_branch
      %16 = sbr.rel (0) target = $region9
    $region8: #{neural_net_forward.1} parent=1 // pred_region
      %s18 = ssub.s32 2048, 2048
      %19 = vsyncadd [#allocation4], %s18
      %s20 = sshll.u32 [#allocation3], 4
      %s21 = int_to_ptr.vmem [resolvable:$true] %s20
      %26 = dma.hbm_to_vmem [thread:$0]  %s1, 2048, %s21, [#allocation4], 128, 128, 8
    $region9: #{neural_net_forward.1} parent=1 // pred_fallthru
      _
    // Predicated region
    $region10: #{neural_net_forward.1} parent=1 // pred_check
      _
    $region11: #{neural_net_forward.1} parent=1 // pred_check_branch
      %28 = sbr.rel (0) target = $region13
    $region12: #{neural_net_forward.1} parent=1 // pred_region
      _
    $region13: #{neural_net_forward.1} parent=1 // pred_fallthru
      _
    // Predicated region
    $region14: #{neural_net_forward.1} parent=1 // pred_check
      _
    $region15: #{neural_net_forward.1} parent=1 // pred_check_branch
      %30 = sbr.rel (0) target = $region17
    $region16: #{neural_net_forward.1} parent=1 // pred_region
      %s32 = ssub.s32 2048, 2048
      %33 = vsyncadd [#allocation7], %s32
      %s34 = sshll.u32 [#allocation6], 4
      %s35 = int_to_ptr.vmem [resolvable:$true] %s34
      %40 = dma.hbm_to_vmem [thread:$0]  %s3, 2048, %s35, [#allocation7], 128, 128, 8
    $region17: #{neural_net_forward.1} parent=1 // pred_fallthru
      _
    // Predicated region
    $region18: #{neural_net_forward.1} parent=1 // pred_check
      _
    $region19: #{neural_net_forward.1} parent=1 // pred_check_branch
      %42 = sbr.rel (0) target = $region21
    $region20: #{neural_net_forward.1} parent=1 // pred_region
      _
    $region21: #{neural_net_forward.1} parent=1 // pred_fallthru
      _
    // Predicated region
    $region22: #{neural_net_forward.1} parent=1 // pred_check
      _
    $region23: #{neural_net_forward.1} parent=1 // pred_check_branch
      %44 = sbr.rel (0) target = $region25
    $region24: #{neural_net_forward.1} parent=1 // pred_region
      %45 = dma.done [#allocation4], 2048
    $region25: #{neural_net_forward.1} parent=1 // pred_fallthru
      _
    // Predicated region
    $region26: #{neural_net_forward.1} parent=1 // pred_check
      _
    $region27: #{neural_net_forward.1} parent=1 // pred_check_branch
      %47 = sbr.rel (0) target = $region29
    $region28: #{neural_net_forward.1} parent=1 // pred_region
      %48 = dma.done [#allocation7], 2048
    $region29: #{neural_net_forward.1} parent=1 // pred_fallthru
      _
    %p49 = scmp.eq.s32.totalorder 0, 0
    // Predicated region
    $region30: #{neural_net_forward.1} parent=1 // pred_check
      %p50 = pneg %p49
    $region31: #{neural_net_forward.1} parent=1 // pred_check_branch
      %52 = sbr.rel (%p50) target = $region33
    $region32: #{neural_net_forward.1} parent=1 // pred_region
      %53 = vst [vmem:[#allocation2] sm:$0xff] 0.0
    $region33: #{neural_net_forward.1} parent=1 // pred_fallthru
      _
    %v54 = vld [vmem:[%s0] sm:$0xff]
    %v55 = vld [vmem:[#allocation3] sm:$0xff]
    %v56 = vld [vmem:[#allocation3 + $0x8] sm:$0xff]
    %v57 = vld [vmem:[#allocation3 + $0x10] sm:$0xff]
    %v58 = vld [vmem:[#allocation3 + $0x18] sm:$0xff]
    %v59 = vld [vmem:[#allocation3 + $0x20] sm:$0xff]
    %v60 = vld [vmem:[#allocation3 + $0x28] sm:$0xff]
    %v61 = vld [vmem:[#allocation3 + $0x30] sm:$0xff]
    %v62 = vld [vmem:[#allocation3 + $0x38] sm:$0xff]
    %v63 = vld [vmem:[#allocation3 + $0x40] sm:$0xff]
    %v64 = vld [vmem:[#allocation3 + $0x48] sm:$0xff]
    %v65 = vld [vmem:[#allocation3 + $0x50] sm:$0xff]
    %v66 = vld [vmem:[#allocation3 + $0x58] sm:$0xff]
    %v67 = vld [vmem:[#allocation3 + $0x60] sm:$0xff]
    %v68 = vld [vmem:[#allocation3 + $0x68] sm:$0xff]
    %v69 = vld [vmem:[#allocation3 + $0x70] sm:$0xff]
    %v70 = vld [vmem:[#allocation3 + $0x78] sm:$0xff]
    %v71 = vld [vmem:[%s2] sm:$0x1]
    %v72 = vlaneseq
    %v73 = vshrl.u32 %v72, 7
    %v74 = vsub.s32 0, %v73
    %v75 = vrot.slane %v71, %v74
    %76 = vmatprep.subr.mxu0 0.0
    %77 = vmatpush1.msra.mxu0 %v55
    %78 = vmatprep.subr.mxu0 0.0
    %79 = vmatpush1.msra.mxu0 %v56
    %80 = vmatprep.subr.mxu0 0.0
    %81 = vmatpush1.msra.mxu0 %v57
    %82 = vmatprep.subr.mxu0 0.0
    %83 = vmatpush1.msra.mxu0 %v58
    %84 = vmatprep.subr.mxu0 0.0
    %85 = vmatpush1.msra.mxu0 %v59
    %86 = vmatprep.subr.mxu0 0.0
    %87 = vmatpush1.msra.mxu0 %v60
    %88 = vmatprep.subr.mxu0 0.0
    %89 = vmatpush1.msra.mxu0 %v61
    %90 = vmatprep.subr.mxu0 0.0
    %91 = vmatpush1.msra.mxu0 %v62
    %92 = vmatprep.subr.mxu0 0.0
    %93 = vmatpush1.msra.mxu0 %v63
    %94 = vmatprep.subr.mxu0 0.0
    %95 = vmatpush1.msra.mxu0 %v64
    %96 = vmatprep.subr.mxu0 0.0
    %97 = vmatpush1.msra.mxu0 %v65
    %98 = vmatprep.subr.mxu0 0.0
    %99 = vmatpush1.msra.mxu0 %v66
    %100 = vmatprep.subr.mxu0 0.0
    %101 = vmatpush1.msra.mxu0 %v67
    %102 = vmatprep.subr.mxu0 0.0
    %103 = vmatpush1.msra.mxu0 %v68
    %104 = vmatprep.subr.mxu0 0.0
    %105 = vmatpush1.msra.mxu0 %v69
    %106 = vmatprep.subr.mxu0 0.0
    %107 = vmatpush1.msra.mxu0 %v70
    %108 = vmatprep.subr.mxu0 0.0
    %109 = vmatpush1.msra.mxu0 0.0
    %110 = vmatprep.subr.mxu0 0.0
    %111 = vmatpush1.msra.mxu0 0.0
    %112 = vmatprep.subr.mxu0 0.0
    %113 = vmatpush1.msra.mxu0 0.0
    %114 = vmatprep.subr.mxu0 0.0
    %115 = vmatpush1.msra.mxu0 0.0
    %116 = vmatprep.subr.mxu0 0.0
    %117 = vmatpush1.msra.mxu0 0.0
    %118 = vmatprep.subr.mxu0 0.0
    %119 = vmatpush1.msra.mxu0 0.0
    %120 = vmatprep.subr.mxu0 0.0
    %121 = vmatpush1.msra.mxu0 0.0
    %122 = vmatprep.subr.mxu0 0.0
    %123 = vmatpush1.msra.mxu0 0.0
    %124 = vmatprep.subr.mxu0 0.0
    %125 = vmatpush1.msra.mxu0 0.0
    %126 = vmatprep.subr.mxu0 0.0
    %127 = vmatpush1.msra.mxu0 0.0
    %128 = vmatprep.subr.mxu0 0.0
    %129 = vmatpush1.msra.mxu0 0.0
    %130 = vmatprep.subr.mxu0 0.0
    %131 = vmatpush1.msra.mxu0 0.0
    %132 = vmatprep.subr.mxu0 0.0
    %133 = vmatpush1.msra.mxu0 0.0
    %134 = vmatprep.subr.mxu0 0.0
    %135 = vmatpush1.msra.mxu0 0.0
    %136 = vmatprep.subr.mxu0 0.0
    %137 = vmatpush1.msra.mxu0 0.0
    %138 = vmatprep.subr.mxu0 0.0
    %139 = vmatpush1.msra.mxu0 0.0
    %140 = vmatprep.mubr.f32.mxu0 0.0
    %141 = vmatmul.mubr.f32.gmra.mrb[0].mxu0 %v54
    %v142 = vpop.f32.mrb[0].mxu0
    %v143 = vadd.f32 %v75, %v142
    %v144 = vpop.f32.mrb[0].mxu0
    %145 = vdwg.mxu0
    %v146 = vmax.f32 %v143, 0.0
    %v147 = vld [vmem:[#allocation2] sm:$0xff]
    %v148 = vld [vmem:[#allocation6] sm:$0xff]
    %v149 = vld [vmem:[#allocation6 + $0x8] sm:$0xff]
    %v150 = vld [vmem:[#allocation6 + $0x10] sm:$0xff]
    %v151 = vld [vmem:[#allocation6 + $0x18] sm:$0xff]
    %v152 = vld [vmem:[#allocation6 + $0x20] sm:$0xff]
    %v153 = vld [vmem:[#allocation6 + $0x28] sm:$0xff]
    %v154 = vld [vmem:[#allocation6 + $0x30] sm:$0xff]
    %v155 = vld [vmem:[#allocation6 + $0x38] sm:$0xff]
    %v156 = vld [vmem:[#allocation6 + $0x40] sm:$0xff]
    %v157 = vld [vmem:[#allocation6 + $0x48] sm:$0xff]
    %v158 = vld [vmem:[#allocation6 + $0x50] sm:$0xff]
    %v159 = vld [vmem:[#allocation6 + $0x58] sm:$0xff]
    %v160 = vld [vmem:[#allocation6 + $0x60] sm:$0xff]
    %v161 = vld [vmem:[#allocation6 + $0x68] sm:$0xff]
    %v162 = vld [vmem:[#allocation6 + $0x70] sm:$0xff]
    %v163 = vld [vmem:[#allocation6 + $0x78] sm:$0xff]
    %164 = vmatprep.subr.mxu0 0.0
    %165 = vmatpush1.msra.mxu0 %v148
    %166 = vmatprep.subr.mxu0 0.0
    %167 = vmatpush1.msra.mxu0 %v149
    %168 = vmatprep.subr.mxu0 0.0
    %169 = vmatpush1.msra.mxu0 %v150
    %170 = vmatprep.subr.mxu0 0.0
    %171 = vmatpush1.msra.mxu0 %v151
    %172 = vmatprep.subr.mxu0 0.0
    %173 = vmatpush1.msra.mxu0 %v152
    %174 = vmatprep.subr.mxu0 0.0
    %175 = vmatpush1.msra.mxu0 %v153
    %176 = vmatprep.subr.mxu0 0.0
    %177 = vmatpush1.msra.mxu0 %v154
    %178 = vmatprep.subr.mxu0 0.0
    %179 = vmatpush1.msra.mxu0 %v155
    %180 = vmatprep.subr.mxu0 0.0
    %181 = vmatpush1.msra.mxu0 %v156
    %182 = vmatprep.subr.mxu0 0.0
    %183 = vmatpush1.msra.mxu0 %v157
    %184 = vmatprep.subr.mxu0 0.0
    %185 = vmatpush1.msra.mxu0 %v158
    %186 = vmatprep.subr.mxu0 0.0
    %187 = vmatpush1.msra.mxu0 %v159
    %188 = vmatprep.subr.mxu0 0.0
    %189 = vmatpush1.msra.mxu0 %v160
    %190 = vmatprep.subr.mxu0 0.0
    %191 = vmatpush1.msra.mxu0 %v161
    %192 = vmatprep.subr.mxu0 0.0
    %193 = vmatpush1.msra.mxu0 %v162
    %194 = vmatprep.subr.mxu0 0.0
    %195 = vmatpush1.msra.mxu0 %v163
    %196 = vmatprep.subr.mxu0 0.0
    %197 = vmatpush1.msra.mxu0 0.0
    %198 = vmatprep.subr.mxu0 0.0
    %199 = vmatpush1.msra.mxu0 0.0
    %200 = vmatprep.subr.mxu0 0.0
    %201 = vmatpush1.msra.mxu0 0.0
    %202 = vmatprep.subr.mxu0 0.0
    %203 = vmatpush1.msra.mxu0 0.0
    %204 = vmatprep.subr.mxu0 0.0
    %205 = vmatpush1.msra.mxu0 0.0
    %206 = vmatprep.subr.mxu0 0.0
    %207 = vmatpush1.msra.mxu0 0.0
    %208 = vmatprep.subr.mxu0 0.0
    %209 = vmatpush1.msra.mxu0 0.0
    %210 = vmatprep.subr.mxu0 0.0
    %211 = vmatpush1.msra.mxu0 0.0
    %212 = vmatprep.subr.mxu0 0.0
    %213 = vmatpush1.msra.mxu0 0.0
    %214 = vmatprep.subr.mxu0 0.0
    %215 = vmatpush1.msra.mxu0 0.0
    %216 = vmatprep.subr.mxu0 0.0
    %217 = vmatpush1.msra.mxu0 0.0
    %218 = vmatprep.subr.mxu0 0.0
    %219 = vmatpush1.msra.mxu0 0.0
    %220 = vmatprep.subr.mxu0 0.0
    %221 = vmatpush1.msra.mxu0 0.0
    %222 = vmatprep.subr.mxu0 0.0
    %223 = vmatpush1.msra.mxu0 0.0
    %224 = vmatprep.subr.mxu0 0.0
    %225 = vmatpush1.msra.mxu0 0.0
    %226 = vmatprep.subr.mxu0 0.0
    %227 = vmatpush1.msra.mxu0 0.0
    %228 = vmatprep.mubr.f32.mxu0 0.0
    %229 = vmatmul.mubr.f32.gmra.mrb[0].mxu0 %v146
    %v230 = vpop.f32.mrb[0].mxu0
    %v231 = vadd.f32 0.0, %v230
    %v232 = vpop.f32.mrb[0].mxu0
    %233 = vdwg.mxu0
    %v234 = vadd.f32 %v147, %v231
    %235 = vst [vmem:[#allocation2] sm:$0xff] %v234
    // Predicated region
    $region34: #{neural_net_forward.1} parent=1 // pred_check
      %p236 = pneg %p49
    $region35: #{neural_net_forward.1} parent=1 // pred_check_branch
      %238 = sbr.rel (%p236) target = $region37
    $region36: #{neural_net_forward.1} parent=1 // pred_region
      %v239 = vld [vmem:[#allocation2] sm:$0xff]
      %v240 = vld [vmem:[%s4] sm:$0x1]
      %v241 = vlaneseq
      %v242 = vshrl.u32 %v241, 7
      %v243 = vsub.s32 0, %v242
      %v244 = vrot.slane %v240, %v243
      %v245 = vadd.f32 %v239, %v244
      %246 = vst [vmem:[#allocation8] sm:$0xff] %v245
    $region37: #{neural_net_forward.1} parent=1 // pred_fallthru
      _
    // Predicated region
    $region38: #{neural_net_forward.1} parent=1 // pred_check
      _
    $region39: #{neural_net_forward.1} parent=1 // pred_check_branch
      %248 = sbr.rel (0) target = $region41
    $region40: #{neural_net_forward.1} parent=1 // pred_region
      %s250 = ssub.s32 128, 128
      %251 = vsyncadd [#allocation5], %s250
      %s253 = sshll.u32 [#allocation8], 4
      %s254 = int_to_ptr.vmem [resolvable:$true] %s253
      %256 = dma.vmem_to_hbm [thread:$0]  %s254, 128, %s5, [#allocation5]
    $region41: #{neural_net_forward.1} parent=1 // pred_fallthru
      _
    // Predicated region
    $region42: #{neural_net_forward.1} parent=1 // pred_check
      _
    $region43: #{neural_net_forward.1} parent=1 // pred_check_branch
      %258 = sbr.rel (0) target = $region45
    $region44: #{neural_net_forward.1} parent=1 // pred_region
      %259 = dma.done [#allocation5], 128
    $region45: #{neural_net_forward.1} parent=1 // pred_fallthru
      _
    %260 = vsyncpa [#allocation4], 1
    %261 = vsyncpa [#allocation7], 1
    %262 = vsyncpa [#allocation5], 1

// kernel: neural_net_forward.1
$region0: #{neural_net_forward.1}
  #allocation0 [shape = 'u32[]', space=smem, size = 0x4, offset = 0x4, fixed_abs, tag = 'smem constant byte address 0x4 - core index']
  #allocation1 [shape = 'u32[144,128]{1,0:T(1,128)}', space=vmem, size = 0x12000, scoped, tag = 'internal scratch']
  #allocation2 [shape = 'f32[8,128]{1,0:T(8,128)}', space=vmem, size = 0x1000, scoped, tag = 'scratch operand']
  %s0 = inlined_call_operand.vmem [shape: f32[8,128], index: 0, kind: input, shape index: {}]
  %s1 = inlined_call_operand.hbm [shape: f32[128,128], index: 1, kind: input, shape index: {}]
  %s2 = inlined_call_operand.vmem [shape: f32[8,128], index: 2, kind: input, shape index: {}]
  %s3 = inlined_call_operand.hbm [shape: f32[128,128], index: 3, kind: input, shape index: {}]
  %s4 = inlined_call_operand.vmem [shape: f32[8,128], index: 4, kind: input, shape index: {}]
  %s5 = inlined_call_operand.hbm [shape: f32[8,128], index: 5, kind: output, shape index: {}]
  %s6 = sld [smem:[#allocation0]]
  $region46: #{neural_net_forward.1} parent=0
    _
  %s8 = ssub.s32 1, %s6
  %s9 = scalar_select 0, %s8, %s6
  $region1: #{neural_net_forward.1} parent=0
    #allocation3 [shape = 'u8[65536]{0}', space=vmem, size = 0x10000, scoped, tag = 'input window, operand 1, single buffered']
    #allocation4 [shape = 's32[1]{0}', space=sflag, size = 0x4, scoped, tag = 'scoped memory for neural_net_forward.1']
    #allocation5 [shape = 's32[1]{0}', space=sflag, size = 0x4, scoped, tag = 'scoped memory for neural_net_forward.1']
    #allocation6 [shape = 'u8[65536]{0}', space=vmem, size = 0x10000, scoped, tag = 'input window, operand 3, single buffered']
    #allocation7 [shape = 's32[1]{0}', space=sflag, size = 0x4, scoped, tag = 'scoped memory for neural_net_forward.1']
    #allocation8 [shape = 'u8[4096]{0}', space=vmem, size = 0x1000, scoped, tag = 'output window, operand 0, single buffered']
    %10 = vsyncpa [#allocation4], 0
    %11 = vsyncpa [#allocation7], 0
    %12 = vsyncpa [#allocation5], 0
    // Predicated region
    $region2: #{neural_net_forward.1} parent=1 // pred_check
      _
    $region3: #{neural_net_forward.1} parent=1 // pred_check_branch
      %14 = sbr.rel (0) target = $region5
    $region4: #{neural_net_forward.1} parent=1 // pred_region
      _
    $region5: #{neural_net_forward.1} parent=1 // pred_fallthru
      _
    // Predicated region
    $region6: #{neural_net_forward.1} parent=1 // pred_check
      _
    $region7: #{neural_net_forward.1} parent=1 // pred_check_branch
      %16 = sbr.rel (0) target = $region9
    $region8: #{neural_net_forward.1} parent=1 // pred_region
      %s18 = ssub.s32 2048, 2048
      %19 = vsyncadd [#allocation4], %s18
      %s20 = sshll.u32 [#allocation3], 4
      %s21 = int_to_ptr.vmem [resolvable:$true] %s20
      %26 = dma.hbm_to_vmem [thread:$0]  %s1, 2048, %s21, [#allocation4], 128, 128, 8
    $region9: #{neural_net_forward.1} parent=1 // pred_fallthru
      _
    // Predicated region
    $region10: #{neural_net_forward.1} parent=1 // pred_check
      _
    $region11: #{neural_net_forward.1} parent=1 // pred_check_branch
      %28 = sbr.rel (0) target = $region13
    $region12: #{neural_net_forward.1} parent=1 // pred_region
      _
    $region13: #{neural_net_forward.1} parent=1 // pred_fallthru
      _
    // Predicated region
    $region14: #{neural_net_forward.1} parent=1 // pred_check
      _
    $region15: #{neural_net_forward.1} parent=1 // pred_check_branch
      %30 = sbr.rel (0) target = $region17
    $region16: #{neural_net_forward.1} parent=1 // pred_region
      %s32 = ssub.s32 2048, 2048
      %33 = vsyncadd [#allocation7], %s32
      %s34 = sshll.u32 [#allocation6], 4
      %s35 = int_to_ptr.vmem [resolvable:$true] %s34
      %40 = dma.hbm_to_vmem [thread:$0]  %s3, 2048, %s35, [#allocation7], 128, 128, 8
    $region17: #{neural_net_forward.1} parent=1 // pred_fallthru
      _
    // Predicated region
    $region18: #{neural_net_forward.1} parent=1 // pred_check
      _
    $region19: #{neural_net_forward.1} parent=1 // pred_check_branch
      %42 = sbr.rel (0) target = $region21
    $region20: #{neural_net_forward.1} parent=1 // pred_region
      _
    $region21: #{neural_net_forward.1} parent=1 // pred_fallthru
      _
    // Predicated region
    $region22: #{neural_net_forward.1} parent=1 // pred_check
      _
    $region23: #{neural_net_forward.1} parent=1 // pred_check_branch
      %44 = sbr.rel (0) target = $region25
    $region24: #{neural_net_forward.1} parent=1 // pred_region
      %45 = dma.done [#allocation4], 2048
    $region25: #{neural_net_forward.1} parent=1 // pred_fallthru
      _
    // Predicated region
    $region26: #{neural_net_forward.1} parent=1 // pred_check
      _
    $region27: #{neural_net_forward.1} parent=1 // pred_check_branch
      %47 = sbr.rel (0) target = $region29
    $region28: #{neural_net_forward.1} parent=1 // pred_region
      %48 = dma.done [#allocation7], 2048
    $region29: #{neural_net_forward.1} parent=1 // pred_fallthru
      _
    %p49 = scmp.eq.s32.totalorder 0, 0
    // Predicated region
    $region30: #{neural_net_forward.1} parent=1 // pred_check
      %p50 = pneg %p49
    $region31: #{neural_net_forward.1} parent=1 // pred_check_branch
      %52 = sbr.rel (%p50) target = $region33
    $region32: #{neural_net_forward.1} parent=1 // pred_region
      %53 = vst [vmem:[#allocation2] sm:$0xff] 0.0
    $region33: #{neural_net_forward.1} parent=1 // pred_fallthru
      _
    %v54 = vld [vmem:[%s0] sm:$0xff]
    %v55 = vld [vmem:[#allocation3] sm:$0xff]
    %v56 = vld [vmem:[#allocation3 + $0x8] sm:$0xff]
    %v57 = vld [vmem:[#allocation3 + $0x10] sm:$0xff]
    %v58 = vld [vmem:[#allocation3 + $0x18] sm:$0xff]
    %v59 = vld [vmem:[#allocation3 + $0x20] sm:$0xff]
    %v60 = vld [vmem:[#allocation3 + $0x28] sm:$0xff]
    %v61 = vld [vmem:[#allocation3 + $0x30] sm:$0xff]
    %v62 = vld [vmem:[#allocation3 + $0x38] sm:$0xff]
    %v63 = vld [vmem:[#allocation3 + $0x40] sm:$0xff]
    %v64 = vld [vmem:[#allocation3 + $0x48] sm:$0xff]
    %v65 = vld [vmem:[#allocation3 + $0x50] sm:$0xff]
    %v66 = vld [vmem:[#allocation3 + $0x58] sm:$0xff]
    %v67 = vld [vmem:[#allocation3 + $0x60] sm:$0xff]
    %v68 = vld [vmem:[#allocation3 + $0x68] sm:$0xff]
    %v69 = vld [vmem:[#allocation3 + $0x70] sm:$0xff]
    %v70 = vld [vmem:[#allocation3 + $0x78] sm:$0xff]
    %v71 = vld [vmem:[%s2] sm:$0x1]
    %v72 = vlaneseq
    %v73 = vshrl.u32 %v72, 7
    %v74 = vsub.s32 0, %v73
    %v75 = vrot.slane %v71, %v74
    %76 = vmatprep.subr.mxu0 0.0
    %77 = vmatpush1.msra.mxu0 %v55
    %78 = vmatprep.subr.mxu0 0.0
    %79 = vmatpush1.msra.mxu0 %v56
    %80 = vmatprep.subr.mxu0 0.0
    %81 = vmatpush1.msra.mxu0 %v57
    %82 = vmatprep.subr.mxu0 0.0
    %83 = vmatpush1.msra.mxu0 %v58
    %84 = vmatprep.subr.mxu0 0.0
    %85 = vmatpush1.msra.mxu0 %v59
    %86 = vmatprep.subr.mxu0 0.0
    %87 = vmatpush1.msra.mxu0 %v60
    %88 = vmatprep.subr.mxu0 0.0
    %89 = vmatpush1.msra.mxu0 %v61
    %90 = vmatprep.subr.mxu0 0.0
    %91 = vmatpush1.msra.mxu0 %v62
    %92 = vmatprep.subr.mxu0 0.0
    %93 = vmatpush1.msra.mxu0 %v63
    %94 = vmatprep.subr.mxu0 0.0
    %95 = vmatpush1.msra.mxu0 %v64
    %96 = vmatprep.subr.mxu0 0.0
    %97 = vmatpush1.msra.mxu0 %v65
    %98 = vmatprep.subr.mxu0 0.0
    %99 = vmatpush1.msra.mxu0 %v66
    %100 = vmatprep.subr.mxu0 0.0
    %101 = vmatpush1.msra.mxu0 %v67
    %102 = vmatprep.subr.mxu0 0.0
    %103 = vmatpush1.msra.mxu0 %v68
    %104 = vmatprep.subr.mxu0 0.0
    %105 = vmatpush1.msra.mxu0 %v69
    %106 = vmatprep.subr.mxu0 0.0
    %107 = vmatpush1.msra.mxu0 %v70
    %108 = vmatprep.subr.mxu0 0.0
    %109 = vmatpush1.msra.mxu0 0.0
    %110 = vmatprep.subr.mxu0 0.0
    %111 = vmatpush1.msra.mxu0 0.0
    %112 = vmatprep.subr.mxu0 0.0
    %113 = vmatpush1.msra.mxu0 0.0
    %114 = vmatprep.subr.mxu0 0.0
    %115 = vmatpush1.msra.mxu0 0.0
    %116 = vmatprep.subr.mxu0 0.0
    %117 = vmatpush1.msra.mxu0 0.0
    %118 = vmatprep.subr.mxu0 0.0
    %119 = vmatpush1.msra.mxu0 0.0
    %120 = vmatprep.subr.mxu0 0.0
    %121 = vmatpush1.msra.mxu0 0.0
    %122 = vmatprep.subr.mxu0 0.0
    %123 = vmatpush1.msra.mxu0 0.0
    %124 = vmatprep.subr.mxu0 0.0
    %125 = vmatpush1.msra.mxu0 0.0
    %126 = vmatprep.subr.mxu0 0.0
    %127 = vmatpush1.msra.mxu0 0.0
    %128 = vmatprep.subr.mxu0 0.0
    %129 = vmatpush1.msra.mxu0 0.0
    %130 = vmatprep.subr.mxu0 0.0
    %131 = vmatpush1.msra.mxu0 0.0
    %132 = vmatprep.subr.mxu0 0.0
    %133 = vmatpush1.msra.mxu0 0.0
    %134 = vmatprep.subr.mxu0 0.0
    %135 = vmatpush1.msra.mxu0 0.0
    %136 = vmatprep.subr.mxu0 0.0
    %137 = vmatpush1.msra.mxu0 0.0
    %138 = vmatprep.subr.mxu0 0.0
    %139 = vmatpush1.msra.mxu0 0.0
    %140 = vmatprep.mubr.f32.mxu0 0.0
    %141 = vmatmul.mubr.f32.gmra.mrb[0].mxu0 %v54
    %v142 = vpop.f32.mrb[0].mxu0
    %v143 = vadd.f32 %v75, %v142
    %v144 = vpop.f32.mrb[0].mxu0
    %145 = vdwg.mxu0
    %v146 = vmax.f32 %v143, 0.0
    %v147 = vld [vmem:[#allocation2] sm:$0xff]
    %v148 = vld [vmem:[#allocation6] sm:$0xff]
    %v149 = vld [vmem:[#allocation6 + $0x8] sm:$0xff]
    %v150 = vld [vmem:[#allocation6 + $0x10] sm:$0xff]
    %v151 = vld [vmem:[#allocation6 + $0x18] sm:$0xff]
    %v152 = vld [vmem:[#allocation6 + $0x20] sm:$0xff]
    %v153 = vld [vmem:[#allocation6 + $0x28] sm:$0xff]
    %v154 = vld [vmem:[#allocation6 + $0x30] sm:$0xff]
    %v155 = vld [vmem:[#allocation6 + $0x38] sm:$0xff]
    %v156 = vld [vmem:[#allocation6 + $0x40] sm:$0xff]
    %v157 = vld [vmem:[#allocation6 + $0x48] sm:$0xff]
    %v158 = vld [vmem:[#allocation6 + $0x50] sm:$0xff]
    %v159 = vld [vmem:[#allocation6 + $0x58] sm:$0xff]
    %v160 = vld [vmem:[#allocation6 + $0x60] sm:$0xff]
    %v161 = vld [vmem:[#allocation6 + $0x68] sm:$0xff]
    %v162 = vld [vmem:[#allocation6 + $0x70] sm:$0xff]
    %v163 = vld [vmem:[#allocation6 + $0x78] sm:$0xff]
    %164 = vmatprep.subr.mxu0 0.0
    %165 = vmatpush1.msra.mxu0 %v148
    %166 = vmatprep.subr.mxu0 0.0
    %167 = vmatpush1.msra.mxu0 %v149
    %168 = vmatprep.subr.mxu0 0.0
    %169 = vmatpush1.msra.mxu0 %v150
    %170 = vmatprep.subr.mxu0 0.0
    %171 = vmatpush1.msra.mxu0 %v151
    %172 = vmatprep.subr.mxu0 0.0
    %173 = vmatpush1.msra.mxu0 %v152
    %174 = vmatprep.subr.mxu0 0.0
    %175 = vmatpush1.msra.mxu0 %v153
    %176 = vmatprep.subr.mxu0 0.0
    %177 = vmatpush1.msra.mxu0 %v154
    %178 = vmatprep.subr.mxu0 0.0
    %179 = vmatpush1.msra.mxu0 %v155
    %180 = vmatprep.subr.mxu0 0.0
    %181 = vmatpush1.msra.mxu0 %v156
    %182 = vmatprep.subr.mxu0 0.0
    %183 = vmatpush1.msra.mxu0 %v157
    %184 = vmatprep.subr.mxu0 0.0
    %185 = vmatpush1.msra.mxu0 %v158
    %186 = vmatprep.subr.mxu0 0.0
    %187 = vmatpush1.msra.mxu0 %v159
    %188 = vmatprep.subr.mxu0 0.0
    %189 = vmatpush1.msra.mxu0 %v160
    %190 = vmatprep.subr.mxu0 0.0
    %191 = vmatpush1.msra.mxu0 %v161
    %192 = vmatprep.subr.mxu0 0.0
    %193 = vmatpush1.msra.mxu0 %v162
    %194 = vmatprep.subr.mxu0 0.0
    %195 = vmatpush1.msra.mxu0 %v163
    %196 = vmatprep.subr.mxu0 0.0
    %197 = vmatpush1.msra.mxu0 0.0
    %198 = vmatprep.subr.mxu0 0.0
    %199 = vmatpush1.msra.mxu0 0.0
    %200 = vmatprep.subr.mxu0 0.0
    %201 = vmatpush1.msra.mxu0 0.0
    %202 = vmatprep.subr.mxu0 0.0
    %203 = vmatpush1.msra.mxu0 0.0
    %204 = vmatprep.subr.mxu0 0.0
    %205 = vmatpush1.msra.mxu0 0.0
    %206 = vmatprep.subr.mxu0 0.0
    %207 = vmatpush1.msra.mxu0 0.0
    %208 = vmatprep.subr.mxu0 0.0
    %209 = vmatpush1.msra.mxu0 0.0
    %210 = vmatprep.subr.mxu0 0.0
    %211 = vmatpush1.msra.mxu0 0.0
    %212 = vmatprep.subr.mxu0 0.0
    %213 = vmatpush1.msra.mxu0 0.0
    %214 = vmatprep.subr.mxu0 0.0
    %215 = vmatpush1.msra.mxu0 0.0
    %216 = vmatprep.subr.mxu0 0.0
    %217 = vmatpush1.msra.mxu0 0.0
    %218 = vmatprep.subr.mxu0 0.0
    %219 = vmatpush1.msra.mxu0 0.0
    %220 = vmatprep.subr.mxu0 0.0
    %221 = vmatpush1.msra.mxu0 0.0
    %222 = vmatprep.subr.mxu0 0.0
    %223 = vmatpush1.msra.mxu0 0.0
    %224 = vmatprep.subr.mxu0 0.0
    %225 = vmatpush1.msra.mxu0 0.0
    %226 = vmatprep.subr.mxu0 0.0
    %227 = vmatpush1.msra.mxu0 0.0
    %228 = vmatprep.mubr.f32.mxu0 0.0
    %229 = vmatmul.mubr.f32.gmra.mrb[0].mxu0 %v146
    %v230 = vpop.f32.mrb[0].mxu0
    %v231 = vadd.f32 0.0, %v230
    %v232 = vpop.f32.mrb[0].mxu0
    %233 = vdwg.mxu0
    %v234 = vadd.f32 %v147, %v231
    %235 = vst [vmem:[#allocation2] sm:$0xff] %v234
    // Predicated region
    $region34: #{neural_net_forward.1} parent=1 // pred_check
      %p236 = pneg %p49
    $region35: #{neural_net_forward.1} parent=1 // pred_check_branch
      %238 = sbr.rel (%p236) target = $region37
    $region36: #{neural_net_forward.1} parent=1 // pred_region
      %v239 = vld [vmem:[#allocation2] sm:$0xff]
      %v240 = vld [vmem:[%s4] sm:$0x1]
      %v241 = vlaneseq
      %v242 = vshrl.u32 %v241, 7
      %v243 = vsub.s32 0, %v242
      %v244 = vrot.slane %v240, %v243
      %v245 = vadd.f32 %v239, %v244
      %246 = vst [vmem:[#allocation8] sm:$0xff] %v245
    $region37: #{neural_net_forward.1} parent=1 // pred_fallthru
      _
    // Predicated region
    $region38: #{neural_net_forward.1} parent=1 // pred_check
      _
    $region39: #{neural_net_forward.1} parent=1 // pred_check_branch
      %248 = sbr.rel (0) target = $region41
    $region40: #{neural_net_forward.1} parent=1 // pred_region
      %s250 = ssub.s32 128, 128
      %251 = vsyncadd [#allocation5], %s250
      %s253 = sshll.u32 [#allocation8], 4
      %s254 = int_to_ptr.vmem [resolvable:$true] %s253
      %256 = dma.vmem_to_hbm [thread:$0]  %s254, 128, %s5, [#allocation5]
    $region41: #{neural_net_forward.1} parent=1 // pred_fallthru
      _
    // Predicated region
    $region42: #{neural_net_forward.1} parent=1 // pred_check
      _
    $region43: #{neural_net_forward.1} parent=1 // pred_check_branch
      %258 = sbr.rel (0) target = $region45
    $region44: #{neural_net_forward.1} parent=1 // pred_region
      %259 = dma.done [#allocation5], 128
    $region45: #{neural_net_forward.1} parent=1 // pred_fallthru
      _
    %260 = vsyncpa [#allocation4], 1
    %261 = vsyncpa [#allocation7], 1
    %262 = vsyncpa [#allocation5], 1

</llo_original>
